<compile_context>
chip_gen: v7x
topology: tpu7x:2x2x1
jax: 0.10.0
libtpu: 0.0.40
codegen_flags: <defaults>
</compile_context>

<pallas_src>
import jax
import jax.numpy as jnp
from jax import lax
from jax.experimental import pallas as pl
from jax.experimental.pallas import tpu as pltpu


def _pool_kernel(pm_ref, x_ref, o_ref, acc_ref):
    # pm_ref : (Bb, num_pool*M, Nk)  pools stacked along rows, contraction dim N lane-dense
    # x_ref  : (Bb, Nk, F)
    # o_ref  : (Bb, M, num_pool*F)
    # acc_ref: (Bb, num_pool*M, F)   f32 accumulator, resident across the contraction axis
    k = pl.program_id(1)

    @pl.when(k == 0)
    def _init():
        acc_ref[...] = jnp.zeros_like(acc_ref)

    # Single batched MXU matmul per grid step: all pools for all batch elements in the
    # block at once -> amortizes systolic-array fill/drain over num_pool*M rows.
    acc_ref[...] += lax.dot_general(
        pm_ref[...], x_ref[...],
        dimension_numbers=(((2,), (1,)), ((0,), (0,))),
        preferred_element_type=jnp.float32,
    )

    @pl.when(k == pl.num_programs(1) - 1)
    def _finalize():
        m = o_ref.shape[1]
        f = x_ref.shape[2]
        num_pool = pm_ref.shape[1] // m
        acc = acc_ref[...]
        # Direct sliced stores (no concatenate copy). With F % 128 == 0 the lane
        # offsets p*F are 128-aligned -> unmasked lane-dense vst.
        for p in range(num_pool):
            o_ref[:, :, p * f:(p + 1) * f] = (
                acc[:, p * m:(p + 1) * m, :].astype(o_ref.dtype)
            )


def prepare_pool_matrices(pool_matrices_stacked, compute_dtype=jnp.float32):
    """One-time layout plumbing (hoisted out of the per-forward hot path).

    (num_pool, B, N, M) -> (B, num_pool*M, N): pools stacked along the row dim so the
    kernel issues one fused matmul per batch element, with the contraction dim N last
    (lane-dense for the MXU feed).  Pool matrices are fixed parameters, so this and the
    dtype cast should be done once at module init.
    """
    num_pool, B, N, M = pool_matrices_stacked.shape
    pm = jnp.transpose(pool_matrices_stacked, (1, 0, 3, 2))   # (B, num_pool, M, N)
    pm = pm.reshape(B, num_pool * M, N)
    if pm.dtype != compute_dtype:
        pm = pm.astype(compute_dtype)
    return pm


def _divisors_leq(n, cap):
    cap = max(1, min(n, cap))
    return [d for d in range(1, cap + 1) if n % d == 0]


def pool_forward_prepared(pm_prepped, x, num_pool, *,
                          compute_dtype=jnp.float32, out_dtype=jnp.float32,
                          batch_block=8, max_nk=512):
    """pm_prepped: (B, num_pool*M, N) from prepare_pool_matrices
       x:          (B, N, F)
       returns:    (B, M, num_pool*F) out_dtype (f32 by default, matching PyTorch)"""
    B, PM, N = pm_prepped.shape
    Bx, Nx, F = x.shape
    assert (Bx, Nx) == (B, N)
    assert PM % num_pool == 0
    M = PM // num_pool

    if pm_prepped.dtype != compute_dtype:
        pm_prepped = pm_prepped.astype(compute_dtype)
    if x.dtype != compute_dtype:
        x = x.astype(compute_dtype)

    # Contraction-dim tile: full N when small; otherwise a 128-aligned divisor so pm's
    # lane dim stays unpadded and x's sublane dim stays 8-aligned.
    if N <= max_nk:
        Nk = N
    else:
        Nk = next((c for c in range(max_nk - max_nk % 128, 0, -128) if N % c == 0), N)
        # TODO(synk): pad N in the wrapper when no 128-aligned divisor exists.

    # Batch block: largest divisor of B keeping >= 2 steps on the parallel batch axis
    # when B >= 2 (v7x has 2 TensorCores; >= 2 steps also enables pipelining overlap).
    bb_cap = min(batch_block, B if B < 2 else max(1, B // 2))
    bb_cands = _divisors_leq(B, bb_cap)

    cd_bytes = jnp.dtype(compute_dtype).itemsize
    od_bytes = jnp.dtype(out_dtype).itemsize

    try:
        vmem_cap = int(pltpu.get_tpu_info().vmem_capacity_bytes)
    except Exception:
        vmem_cap = 64 * 1024 * 1024
    budget = int(0.75 * vmem_cap)   # ~25% headroom for compiler-internal scratch

    def footprint(bb):
        pm_blk = bb * PM * Nk * cd_bytes
        x_blk = bb * Nk * F * cd_bytes
        o_blk = bb * M * num_pool * F * od_bytes
        acc_blk = bb * PM * F * 4
        return 2 * (pm_blk + x_blk) + o_blk + acc_blk   # double-buffered inputs

    Bb = bb_cands[0]
    for cand in bb_cands:
        if footprint(cand) <= budget:
            Bb = cand

    vmem_limit = int(min(budget, max(16 * 1024 * 1024, 2 * footprint(Bb))))

    grid = (B // Bb, pl.cdiv(N, Nk))

    return pl.pallas_call(
        _pool_kernel,
        out_shape=jax.ShapeDtypeStruct((B, M, num_pool * F), out_dtype),
        grid_spec=pltpu.PrefetchScalarGridSpec(
            num_scalar_prefetch=0,
            grid=grid,
            in_specs=[
                # All pools for this batch block, contraction dim tiled along k.
                pl.BlockSpec((Bb, PM, Nk), lambda b, k: (b, 0, k)),
                # x slab for this batch block, fetched per-k and reused for every pool.
                pl.BlockSpec((Bb, Nk, F), lambda b, k: (b, k, 0)),
            ],
            # Output block resident across k; written once at the last k step.
            out_specs=pl.BlockSpec((Bb, M, num_pool * F), lambda b, k: (b, 0, 0)),
            scratch_shapes=[pltpu.VMEM((Bb, PM, F), jnp.float32)],
        ),
        compiler_params=pltpu.CompilerParams(
            dimension_semantics=("parallel", "arbitrary"),
            vmem_limit_bytes=vmem_limit,
        ),
    )(pm_prepped, x)


def pool_forward(pool_matrices_stacked, x, *, compute_dtype=jnp.float32, **kwargs):
    """Convenience wrapper: prepares pool matrices and runs the kernel (for one-off use;
    in a real model call prepare_pool_matrices once at init and reuse)."""
    num_pool = pool_matrices_stacked.shape[0]
    pm = prepare_pool_matrices(pool_matrices_stacked, compute_dtype)
    return pool_forward_prepared(pm, x, num_pool, compute_dtype=compute_dtype, **kwargs)


def pool_reference(pool_matrices_stacked, x):
    # Pure-JAX reference mirroring the PyTorch Pool.forward.
    outs = []
    for i in range(pool_matrices_stacked.shape[0]):
        pm = jnp.swapaxes(pool_matrices_stacked[i], 1, 2)     # (B, M, N)
        outs.append(jnp.matmul(pm.astype(jnp.float32), x.astype(jnp.float32)))  # (B, M, F)
    return jnp.concatenate(outs, axis=2) if len(outs) > 1 else outs[0]


if __name__ == "__main__":
    # Small shapes consistent with the module: batched node features pooled by
    # num_pool assignment matrices.
    num_pool = 2
    B, N, M, F = 2, 16, 8, 128   # F lane-aligned (multiple of 128)

    key = jax.random.PRNGKey(0)
    k_pm, k_x = jax.random.split(key)
    # Deterministic "parameters": the pool matrices (module stores them at init).
    pool_matrices = jax.random.uniform(k_pm, (num_pool, B, N, M), dtype=jnp.float32)
    x = jax.random.normal(k_x, (B, N, F), dtype=jnp.float32)

    ref = pool_reference(pool_matrices, x)

    # f32 path (exact semantics of the PyTorch module). Layout prep hoisted: done once.
    pm_f32 = prepare_pool_matrices(pool_matrices, jnp.float32)
    out_f32 = jax.block_until_ready(pool_forward_prepared(pm_f32, x, num_pool))
    assert out_f32.shape == (B, M, num_pool * F)
    assert jnp.allclose(out_f32, ref, atol=1e-5, rtol=1e-5)

    # bf16 compute path (v5e/v6e/v7x MXU-friendly), f32 accumulation -> looser tolerance.
    pm_bf16 = prepare_pool_matrices(pool_matrices, jnp.bfloat16)
    out_bf16 = jax.block_until_ready(
        pool_forward_prepared(pm_bf16, x, num_pool, compute_dtype=jnp.bfloat16)
    )
    assert out_bf16.shape == (B, M, num_pool * F)
    assert jnp.allclose(out_bf16, ref, atol=5e-2, rtol=5e-2)

    print("KERNEL_OK")
</pallas_src>

<mosaic_0001>
module attributes {stable_mosaic.version = 11 : i64} {
  func.func @_pool_kernel(%arg0: i32, %arg1: i32, %arg2: memref<1x16x16xf32, #tpu.memory_space<vmem>>, %arg3: memref<1x16x128xf32, #tpu.memory_space<vmem>>, %arg4: memref<1x8x256xf32, #tpu.memory_space<vmem>>, %arg5: memref<1x16x128xf32, #tpu.memory_space<vmem>>) attributes {dimension_semantics = [#tpu.dimension_semantics<parallel>, #tpu.dimension_semantics<arbitrary>], iteration_bounds = array<i64: 2, 1>, scalar_prefetch = 0 : i64, scratch_operands = 1 : i64, tpu.core_type = #tpu.core_type<tc>, window_params = [{transform_indices = @transform_0, window_bounds = array<i64: 1, 16, 16>}, {transform_indices = @transform_1, window_bounds = array<i64: 1, 16, 128>}, {transform_indices = @transform_2, window_bounds = array<i64: 1, 8, 256>}]} {
    %c0_i32 = arith.constant 0 : i32
    %0 = arith.cmpi eq, %arg1, %c0_i32 : i32
    %1 = arith.extui %0 : i1 to i32
    %c0_i32_0 = arith.constant 0 : i32
    %2 = arith.cmpi ne, %1, %c0_i32_0 : i32
    scf.if %2 {
      %cst_14 = arith.constant 0.000000e+00 : f32
      %12 = vector.broadcast %cst_14 : f32 to vector<1x16x128xf32>
      %c0_15 = arith.constant 0 : index
      %c0_16 = arith.constant 0 : index
      %c0_17 = arith.constant 0 : index
      %13 = vector.load %arg5[%c0_15, %c0_16, %c0_17] : memref<1x16x128xf32, #tpu.memory_space<vmem>>, vector<1x16x128xf32>
      tpu.vector_store %arg5[%c0_15, %c0_16, %c0_17], %12 {strides = array<i32>} : memref<1x16x128xf32, #tpu.memory_space<vmem>>, vector<1x16x128xf32>,
    } else {
    }
    %c0 = arith.constant 0 : index
    %c0_1 = arith.constant 0 : index
    %c0_2 = arith.constant 0 : index
    %3 = vector.load %arg5[%c0, %c0_1, %c0_2] : memref<1x16x128xf32, #tpu.memory_space<vmem>>, vector<1x16x128xf32>
    %c0_3 = arith.constant 0 : index
    %c0_4 = arith.constant 0 : index
    %c0_5 = arith.constant 0 : index
    %4 = vector.load %arg2[%c0_3, %c0_4, %c0_5] : memref<1x16x16xf32, #tpu.memory_space<vmem>>, vector<1x16x16xf32>
    %c0_6 = arith.constant 0 : index
    %c0_7 = arith.constant 0 : index
    %c0_8 = arith.constant 0 : index
    %5 = vector.load %arg3[%c0_6, %c0_7, %c0_8] : memref<1x16x128xf32, #tpu.memory_space<vmem>>, vector<1x16x128xf32>
    %cst = arith.constant dense<0.000000e+00> : vector<1x16x128xf32>
    %6 = tpu.matmul %4, %5, %cst {dimension_numbers = #tpu.dot_dimension_numbers<[2], [1], [1], [2], [0, 0, 0, 1, 1, 2], [0], [0]>} : vector<1x16x16xf32>, vector<1x16x128xf32>, vector<1x16x128xf32> -> vector<1x16x128xf32>
    %7 = arith.addf %3, %6 : vector<1x16x128xf32>
    %c0_9 = arith.constant 0 : index
    %c0_10 = arith.constant 0 : index
    %c0_11 = arith.constant 0 : index
    %8 = vector.load %arg5[%c0_9, %c0_10, %c0_11] : memref<1x16x128xf32, #tpu.memory_space<vmem>>, vector<1x16x128xf32>
    tpu.vector_store %arg5[%c0_9, %c0_10, %c0_11], %7 {strides = array<i32>} : memref<1x16x128xf32, #tpu.memory_space<vmem>>, vector<1x16x128xf32>,
    %c0_i32_12 = arith.constant 0 : i32
    %9 = arith.cmpi eq, %arg1, %c0_i32_12 : i32
    %10 = arith.extui %9 : i1 to i32
    %c0_i32_13 = arith.constant 0 : i32
    %11 = arith.cmpi ne, %10, %c0_i32_13 : i32
    scf.if %11 {
      %c0_14 = arith.constant 0 : index
      %c0_15 = arith.constant 0 : index
      %c0_16 = arith.constant 0 : index
      %12 = vector.load %arg5[%c0_14, %c0_15, %c0_16] : memref<1x16x128xf32, #tpu.memory_space<vmem>>, vector<1x16x128xf32>
      %13 = vector.extract_strided_slice %12 {offsets = [0, 0, 0], sizes = [1, 8, 128], strides = [1, 1, 1]} : vector<1x16x128xf32> to vector<1x8x128xf32>
      %c0_17 = arith.constant 0 : index
      %c0_18 = arith.constant 0 : index
      %c0_19 = arith.constant 0 : index
      %14 = vector.load %arg4[%c0_17, %c0_18, %c0_19] : memref<1x8x256xf32, #tpu.memory_space<vmem>>, vector<1x8x128xf32>
      tpu.vector_store %arg4[%c0_17, %c0_18, %c0_19], %13 {strides = array<i32>} : memref<1x8x256xf32, #tpu.memory_space<vmem>>, vector<1x8x128xf32>,
      %15 = vector.extract_strided_slice %12 {offsets = [0, 8, 0], sizes = [1, 8, 128], strides = [1, 1, 1]} : vector<1x16x128xf32> to vector<1x8x128xf32>
      %c0_20 = arith.constant 0 : index
      %c0_21 = arith.constant 0 : index
      %c128 = arith.constant 128 : index
      %16 = vector.load %arg4[%c0_20, %c0_21, %c128] : memref<1x8x256xf32, #tpu.memory_space<vmem>>, vector<1x8x128xf32>
      tpu.vector_store %arg4[%c0_20, %c0_21, %c128], %15 {strides = array<i32>} : memref<1x8x256xf32, #tpu.memory_space<vmem>>, vector<1x8x128xf32>,
    } else {
    }
    return
  }
  func.func @transform_0(%arg0: i32, %arg1: i32) -> (i32, i32, i32) {
    %c0_i32 = arith.constant 0 : i32
    %c0_i32_0 = arith.constant 0 : i32
    return %arg0, %c0_i32, %arg1 : i32, i32, i32
  }
  func.func @transform_1(%arg0: i32, %arg1: i32) -> (i32, i32, i32) {
    %c0_i32 = arith.constant 0 : i32
    %c0_i32_0 = arith.constant 0 : i32
    return %arg0, %arg1, %c0_i32 : i32, i32, i32
  }
  func.func @transform_2(%arg0: i32, %arg1: i32) -> (i32, i32, i32) {
    %c0_i32 = arith.constant 0 : i32
    %c0_i32_0 = arith.constant 0 : i32
    %c0_i32_1 = arith.constant 0 : i32
    return %arg0, %c0_i32, %c0_i32_0 : i32, i32, i32
  }
}

</mosaic_0001>

<llo_original>
// kernel: tpu_custom_call.1
$region0: #{tpu_custom_call.1}
  #allocation0 [shape = 'u32[]', space=smem, size = 0x4, offset = 0x4, fixed_abs, tag = 'smem constant byte address 0x4 - core index']
  #allocation1 [shape = 'u32[144,128]{1,0:T(1,128)}', space=vmem, size = 0x12000, scoped, tag = 'internal scratch']
  #allocation2 [shape = 'f32[1,16,128]{2,1,0:T(8,128)}', space=vmem, size = 0x2000, scoped, tag = 'scratch operand']
  %s0 = inlined_call_operand.hbm [shape: f32[2,16,16], index: 0, kind: input, shape index: {}]
  %s1 = inlined_call_operand.hbm [shape: f32[2,16,128], index: 1, kind: input, shape index: {}]
  %s2 = inlined_call_operand.hbm [shape: f32[2,8,256], index: 2, kind: output, shape index: {}]
  %s3 = sld [smem:[#allocation0]]
  $region57: #{tpu_custom_call.1} parent=0
    _
  %s5 = ssub.s32 1, %s3
  %s6 = scalar_select 0, %s5, %s3
  $region1: #{tpu_custom_call.1} parent=0
    #allocation3 [shape = 'u8[16384]{0}', space=vmem, size = 0x4000, scoped, tag = 'input window, operand 0']
    #allocation4 [shape = 's32[2]{0}', space=sflag, size = 0x8, scoped, tag = 'scoped memory for tpu_custom_call.1']
    #allocation5 [shape = 's32[2]{0}', space=sflag, size = 0x8, scoped, tag = 'scoped memory for tpu_custom_call.1']
    #allocation6 [shape = 'u8[16384]{0}', space=vmem, size = 0x4000, scoped, tag = 'input window, operand 1']
    #allocation7 [shape = 's32[2]{0}', space=sflag, size = 0x8, scoped, tag = 'scoped memory for tpu_custom_call.1']
    #allocation8 [shape = 'u8[16384]{0}', space=vmem, size = 0x4000, scoped, tag = 'output window, operand 0']
    %7 = vsyncpa [#allocation4], 0
    %s8 = scalar_lea.sflag [#allocation4], 1
    %9 = vsyncpa %s8, 0
    %10 = vsyncpa [#allocation7], 0
    %s11 = scalar_lea.sflag [#allocation7], 1
    %12 = vsyncpa %s11, 0
    %13 = vsyncpa [#allocation5], 0
    %s14 = scalar_lea.sflag [#allocation5], 1
    %15 = vsyncpa %s14, 0
    loop: start=0, step=1, limit=4
    $region2: #{tpu_custom_call.1} parent=1 // loop_pre_header
      _
    $region3: #{tpu_custom_call.1} parent=1 // loop_header
      %s17 = sphi 0, %s21
      %p18 = scmp.ge.s32.totalorder %s17, 4
      %s24 = sphi 0, %s36
      %s25 = sphi 0, %s32
      %s26 = sphi 0, %s24
      %s27 = sphi 0, %s25
      %s28 = sphi 0, %s26
      %s29 = sphi 0, %s27
      %s41 = sphi 0, %s43
      %s44 = sphi 0, %s41
      %s45 = sphi 0, %s44
      %s61 = sphi 0, %s45
      %s69 = sphi 0, %s71
      %s72 = sphi 0, %s69
      %s73 = sphi 0, %s72
      %s89 = sphi 0, %s73
      %s95 = sphi 0, %s97
      %s98 = sphi 0, %s95
      %s99 = sphi 0, %s98
      %s115 = sphi 0, %s99
    $region4: #{tpu_custom_call.1} parent=1 // loop_header_branch
      %20 = sbr.rel (%p18) target = $region8
    $region5: #{tpu_custom_call.1} parent=1 // loop_body
      %s22 = ssub.s32 %s17, 1
      %s23 = ssub.s32 %s17, 2
      %s30 = sadd.s32 1, %s25
      %p31 = scmp.ge.s32.totalorder %s30, 1
      %s32 = scalar_select %p31, 0, %s30
      %s33 = sadd.s32 1, %s24
      %s34 = scalar_select %p31, %s33, %s24
      %p35 = scmp.ge.s32.totalorder %s34, 2
      %s36 = scalar_select %p35, 0, %s34
      %s37 = ssub.s32 %s24, %s36
      %s38 = ssub.s32 %s25, %s32
      %s39 = sor.u32 %s37, %s38
      %p40 = scmp.eq.s32.totalorder %s39, 0
      %s42 = sadd.s32 %s41, 1
      %s43 = scalar_select %p40, %s41, %s42
      %p46 = pneg %p40
      %p47 = scmp.eq.s32.totalorder %s17, 1
      %p48 = por %p46, %p47
      %p49 = scmp.ne.s32.totalorder %s41, %s44
      %p50 = scmp.eq.s32.totalorder %s17, 0
      %p51 = por %p49, %p50
      %p52 = scmp.ne.s32.totalorder %s41, %s44
      %p53 = scmp.eq.s32.totalorder %s22, 1
      %p54 = por %p52, %p53
      %p55 = scmp.ne.s32.totalorder %s44, %s45
      %p56 = scmp.eq.s32.totalorder %s22, 0
      %p57 = por %p55, %p56
      %p58 = scmp.ne.s32.totalorder %s44, %s45
      %p59 = scmp.eq.s32.totalorder %s23, 1
      %p60 = por %p58, %p59
      %p62 = scmp.ne.s32.totalorder %s45, %s61
      %p63 = scmp.eq.s32.totalorder %s23, 0
      %p64 = por %p62, %p63
      %s65 = ssub.s32 %s24, %s36
      %s66 = ssub.s32 %s25, %s32
      %s67 = sor.u32 %s65, %s66
      %p68 = scmp.eq.s32.totalorder %s67, 0
      %s70 = sadd.s32 %s69, 1
      %s71 = scalar_select %p68, %s69, %s70
      %p74 = pneg %p68
      %p75 = scmp.eq.s32.totalorder %s17, 1
      %p76 = por %p74, %p75
      %p77 = scmp.ne.s32.totalorder %s69, %s72
      %p78 = scmp.eq.s32.totalorder %s17, 0
      %p79 = por %p77, %p78
      %p80 = scmp.ne.s32.totalorder %s69, %s72
      %p81 = scmp.eq.s32.totalorder %s22, 1
      %p82 = por %p80, %p81
      %p83 = scmp.ne.s32.totalorder %s72, %s73
      %p84 = scmp.eq.s32.totalorder %s22, 0
      %p85 = por %p83, %p84
      %p86 = scmp.ne.s32.totalorder %s72, %s73
      %p87 = scmp.eq.s32.totalorder %s23, 1
      %p88 = por %p86, %p87
      %p90 = scmp.ne.s32.totalorder %s73, %s89
      %p91 = scmp.eq.s32.totalorder %s23, 0
      %p92 = por %p90, %p91
      %s93 = ssub.s32 %s24, %s36
      %p94 = scmp.eq.s32.totalorder %s93, 0
      %s96 = sadd.s32 %s95, 1
      %s97 = scalar_select %p94, %s95, %s96
      %p100 = pneg %p94
      %p101 = scmp.eq.s32.totalorder %s17, 1
      %p102 = por %p100, %p101
      %p103 = scmp.ne.s32.totalorder %s95, %s98
      %p104 = scmp.eq.s32.totalorder %s17, 0
      %p105 = por %p103, %p104
      %p106 = scmp.ne.s32.totalorder %s95, %s98
      %p107 = scmp.eq.s32.totalorder %s22, 1
      %p108 = por %p106, %p107
      %p109 = scmp.ne.s32.totalorder %s98, %s99
      %p110 = scmp.eq.s32.totalorder %s22, 0
      %p111 = por %p109, %p110
      %p112 = scmp.ne.s32.totalorder %s98, %s99
      %p113 = scmp.eq.s32.totalorder %s23, 1
      %p114 = por %p112, %p113
      %p116 = scmp.ne.s32.totalorder %s99, %s115
      %p117 = scmp.eq.s32.totalorder %s23, 0
      %p118 = por %p116, %p117
      %p119 = scmp.le.s32.totalorder 1, %s17
      %p120 = scmp.lt.s32.totalorder %s17, 3
      %p121 = pnand %p119, %p120
      %p122 = pneg %p121
      // Predicated region
      $region9: #{tpu_custom_call.1} parent=5 // pred_check
        _
      $region10: #{tpu_custom_call.1} parent=5 // pred_check_branch
        %124 = sbr.rel (%p121) target = $region12
      $region11: #{tpu_custom_call.1} parent=5 // pred_region
        %s125 = ssub.s32 %s17, 1
      $region12: #{tpu_custom_call.1} parent=5 // pred_fallthru
        _
      %p126 = scmp.lt.s32.totalorder %s17, 2
      // Predicated region
      $region13: #{tpu_custom_call.1} parent=5 // pred_check
        %p127 = pneg %p126
      $region14: #{tpu_custom_call.1} parent=5 // pred_check_branch
        %129 = sbr.rel (%p127) target = $region16
      $region15: #{tpu_custom_call.1} parent=5 // pred_region
        // Predicated region
        $region17: #{tpu_custom_call.1} parent=15 // pred_check
          %p130 = pneg %p51
        $region18: #{tpu_custom_call.1} parent=15 // pred_check_branch
          %132 = sbr.rel (%p130) target = $region20
        $region19: #{tpu_custom_call.1} parent=15 // pred_region
          %s133 = sand.u32 %s41, 1
          %s134 = scalar_lea.sflag [#allocation4], %s133
          %s135 = sand.u32 %s41, 1
          %s136 = smul.addr %s135, 16
          %s137 = scalar_lea.vmem [#allocation3], %s136
          %s139 = ssub.s32 256, 256
          %140 = vsyncadd %s134, %s139
          %s141 = smul.addr %s24, 2
          %s142 = sadd.s32 %s25, %s141
          %s143 = smul.addr %s142, 128
          %s144 = scalar_lea.hbm %s0, %s143
          %s145 = sshll.u32 %s137, 4
          %s146 = int_to_ptr.vmem [resolvable:$true] %s145
          %151 = dma.hbm_to_vmem [thread:$0]  %s144, 256, %s146, %s134, 128, 128, 8
        $region20: #{tpu_custom_call.1} parent=15 // pred_fallthru
          _
        // Predicated region
        $region21: #{tpu_custom_call.1} parent=15 // pred_check
          %p152 = pneg %p79
        $region22: #{tpu_custom_call.1} parent=15 // pred_check_branch
          %154 = sbr.rel (%p152) target = $region24
        $region23: #{tpu_custom_call.1} parent=15 // pred_region
          %s155 = sand.u32 %s69, 1
          %s156 = scalar_lea.sflag [#allocation7], %s155
          %s157 = sand.u32 %s69, 1
          %s158 = smul.addr %s157, 16
          %s159 = scalar_lea.vmem [#allocation6], %s158
          %s160 = smul.u32 2, %s25
          %s162 = ssub.s32 256, 256
          %163 = vsyncadd %s156, %s162
          %s164 = smul.addr %s24, 2
          %s165 = sadd.s32 %s160, %s164
          %s166 = smul.addr %s165, 128
          %s167 = scalar_lea.hbm %s1, %s166
          %s168 = sshll.u32 %s159, 4
          %s169 = int_to_ptr.vmem [resolvable:$true] %s168
          %174 = dma.hbm_to_vmem [thread:$0]  %s167, 256, %s169, %s156, 128, 128, 8
        $region24: #{tpu_custom_call.1} parent=15 // pred_fallthru
          _
      $region16: #{tpu_custom_call.1} parent=5 // pred_fallthru
        _
      %p175 = scmp.le.s32.totalorder 1, %s17
      %p176 = scmp.lt.s32.totalorder %s17, 3
      %p177 = pnand %p175, %p176
      %p178 = pneg %p177
      // Predicated region
      $region25: #{tpu_custom_call.1} parent=5 // pred_check
        _
      $region26: #{tpu_custom_call.1} parent=5 // pred_check_branch
        %180 = sbr.rel (%p177) target = $region28
      $region27: #{tpu_custom_call.1} parent=5 // pred_region
        %s181 = ssub.s32 %s17, 1
        %s182 = sand.u32 %s44, 1
        %s183 = scalar_lea.sflag [#allocation4], %s182
        %s184 = sand.u32 %s44, 1
        %s185 = smul.addr %s184, 16
        %s186 = scalar_lea.vmem [#allocation3], %s185
        // Predicated region
        $region29: #{tpu_custom_call.1} parent=27 // pred_check
          %p187 = pneg %p57
        $region30: #{tpu_custom_call.1} parent=27 // pred_check_branch
          %189 = sbr.rel (%p187) target = $region32
        $region31: #{tpu_custom_call.1} parent=27 // pred_region
          %190 = dma.done %s183, 256
        $region32: #{tpu_custom_call.1} parent=27 // pred_fallthru
          _
        %s191 = sand.u32 %s72, 1
        %s192 = scalar_lea.sflag [#allocation7], %s191
        %s193 = sand.u32 %s72, 1
        %s194 = smul.addr %s193, 16
        %s195 = scalar_lea.vmem [#allocation6], %s194
        // Predicated region
        $region33: #{tpu_custom_call.1} parent=27 // pred_check
          %p196 = pneg %p85
        $region34: #{tpu_custom_call.1} parent=27 // pred_check_branch
          %198 = sbr.rel (%p196) target = $region36
        $region35: #{tpu_custom_call.1} parent=27 // pred_region
          %199 = dma.done %s192, 256
        $region36: #{tpu_custom_call.1} parent=27 // pred_fallthru
          _
        %s200 = sand.u32 %s44, 1
        %s201 = scalar_lea.sflag [#allocation4], %s200
        %s202 = sand.u32 %s44, 1
        %s203 = smul.addr %s202, 16
        %s204 = scalar_lea.vmem [#allocation3], %s203
        %p205 = pneg %p57
        %p206 = pneg %p54
        %s207 = sand.u32 %s72, 1
        %s208 = scalar_lea.sflag [#allocation7], %s207
        %s209 = sand.u32 %s72, 1
        %s210 = smul.addr %s209, 16
        %s211 = scalar_lea.vmem [#allocation6], %s210
        %p212 = pneg %p85
        %p213 = pneg %p82
        %p214 = pneg %p111
        %p215 = pneg %p108
        %s216 = sand.u32 %s98, 1
        %s217 = scalar_lea.sflag [#allocation5], %s216
        %s218 = sand.u32 %s98, 1
        %s219 = smul.addr %s218, 16
        %s220 = scalar_lea.vmem [#allocation8], %s219
        %s221 = smul.u32 2, %s27
        %p222 = scmp.eq.s32.totalorder %s27, 0
        // Predicated region
        $region37: #{tpu_custom_call.1} parent=27 // pred_check
          %p223 = pneg %p222
        $region38: #{tpu_custom_call.1} parent=27 // pred_check_branch
          %225 = sbr.rel (%p223) target = $region40
        $region39: #{tpu_custom_call.1} parent=27 // pred_region
          %226 = vst [vmem:[#allocation2] sm:$0xff] 0.0
          %227 = vst [vmem:[#allocation2 + $0x8] sm:$0xff] 0.0
        $region40: #{tpu_custom_call.1} parent=27 // pred_fallthru
          _
        %v228 = vld [vmem:[#allocation2] sm:$0xff]
        %v229 = vld [vmem:[#allocation2 + $0x8] sm:$0xff]
        %v230 = vld [vmem:[%s186] sm:$0xff]
        %v231 = vld [vmem:[%s186 + $0x8] sm:$0xff]
        %v232 = vld [vmem:[%s195] sm:$0xff]
        %v233 = vld [vmem:[%s195 + $0x8] sm:$0xff]
        %vm234 = vcmask 130048
        %v236 = vsel %vm234, %v230, 0
        %v239 = vsel %vm234, %v231, 0
        %241 = vmatprep.subr.mxu0 0.0
        %242 = vmatpush1.msra.mxu0 %v232
        %243 = vmatprep.subr.mxu0 0.0
        %244 = vmatpush1.msra.mxu0 %v233
        %245 = vmatprep.subr.mxu0 0.0
        %246 = vmatpush1.msra.mxu0 0.0
        %247 = vmatprep.subr.mxu0 0.0
        %248 = vmatpush1.msra.mxu0 0.0
        %249 = vmatprep.subr.mxu0 0.0
        %250 = vmatpush1.msra.mxu0 0.0
        %251 = vmatprep.subr.mxu0 0.0
        %252 = vmatpush1.msra.mxu0 0.0
        %253 = vmatprep.subr.mxu0 0.0
        %254 = vmatpush1.msra.mxu0 0.0
        %255 = vmatprep.subr.mxu0 0.0
        %256 = vmatpush1.msra.mxu0 0.0
        %257 = vmatprep.subr.mxu0 0.0
        %258 = vmatpush1.msra.mxu0 0.0
        %259 = vmatprep.subr.mxu0 0.0
        %260 = vmatpush1.msra.mxu0 0.0
        %261 = vmatprep.subr.mxu0 0.0
        %262 = vmatpush1.msra.mxu0 0.0
        %263 = vmatprep.subr.mxu0 0.0
        %264 = vmatpush1.msra.mxu0 0.0
        %265 = vmatprep.subr.mxu0 0.0
        %266 = vmatpush1.msra.mxu0 0.0
        %267 = vmatprep.subr.mxu0 0.0
        %268 = vmatpush1.msra.mxu0 0.0
        %269 = vmatprep.subr.mxu0 0.0
        %270 = vmatpush1.msra.mxu0 0.0
        %271 = vmatprep.subr.mxu0 0.0
        %272 = vmatpush1.msra.mxu0 0.0
        %273 = vmatprep.subr.mxu0 0.0
        %274 = vmatpush1.msra.mxu0 0.0
        %275 = vmatprep.subr.mxu0 0.0
        %276 = vmatpush1.msra.mxu0 0.0
        %277 = vmatprep.subr.mxu0 0.0
        %278 = vmatpush1.msra.mxu0 0.0
        %279 = vmatprep.subr.mxu0 0.0
        %280 = vmatpush1.msra.mxu0 0.0
        %281 = vmatprep.subr.mxu0 0.0
        %282 = vmatpush1.msra.mxu0 0.0
        %283 = vmatprep.subr.mxu0 0.0
        %284 = vmatpush1.msra.mxu0 0.0
        %285 = vmatprep.subr.mxu0 0.0
        %286 = vmatpush1.msra.mxu0 0.0
        %287 = vmatprep.subr.mxu0 0.0
        %288 = vmatpush1.msra.mxu0 0.0
        %289 = vmatprep.subr.mxu0 0.0
        %290 = vmatpush1.msra.mxu0 0.0
        %291 = vmatprep.subr.mxu0 0.0
        %292 = vmatpush1.msra.mxu0 0.0
        %293 = vmatprep.subr.mxu0 0.0
        %294 = vmatpush1.msra.mxu0 0.0
        %295 = vmatprep.subr.mxu0 0.0
        %296 = vmatpush1.msra.mxu0 0.0
        %297 = vmatprep.subr.mxu0 0.0
        %298 = vmatpush1.msra.mxu0 0.0
        %299 = vmatprep.subr.mxu0 0.0
        %300 = vmatpush1.msra.mxu0 0.0
        %301 = vmatprep.subr.mxu0 0.0
        %302 = vmatpush1.msra.mxu0 0.0
        %303 = vmatprep.subr.mxu0 0.0
        %304 = vmatpush1.msra.mxu0 0.0
        %305 = vmatprep.mubr.f32.mxu0 0.0
        %306 = vmatmul.mubr.f32.gmra.mrb[0].mxu0 %v236
        %v307 = vpop.f32.mrb[0].mxu0
        %v308 = vadd.f32 0.0, %v307
        %v309 = vpop.f32.mrb[0].mxu0
        %310 = vmatprep.mubr.f32.mxu0 0.0
        %311 = vmatmul.mubr.f32.gmra.mrb[0].mxu0 %v239
        %v312 = vpop.f32.mrb[0].mxu0
        %v313 = vadd.f32 0.0, %v312
        %v314 = vpop.f32.mrb[0].mxu0
        %315 = vdwg.mxu0
        %v316 = vadd.f32 %v228, %v308
        %v317 = vadd.f32 %v229, %v313
        %318 = vst [vmem:[#allocation2] sm:$0xff] %v316
        %319 = vst [vmem:[#allocation2 + $0x8] sm:$0xff] %v317
        // Predicated region
        $region41: #{tpu_custom_call.1} parent=27 // pred_check
          %p320 = pneg %p222
        $region42: #{tpu_custom_call.1} parent=27 // pred_check_branch
          %322 = sbr.rel (%p320) target = $region44
        $region43: #{tpu_custom_call.1} parent=27 // pred_region
          %v323 = vld [vmem:[#allocation2] sm:$0xff]
          %v324 = vld [vmem:[#allocation2 + $0x8] sm:$0xff]
          %325 = vst [vmem:[%s220] sm:$0xff] %v323
          %326 = vst [vmem:[%s220 + $0x8] sm:$0xff] %v324
        $region44: #{tpu_custom_call.1} parent=27 // pred_fallthru
          _
        %s327 = sand.u32 %s98, 1
        %s328 = scalar_lea.sflag [#allocation5], %s327
        %s329 = sand.u32 %s98, 1
        %s330 = smul.addr %s329, 16
        %s331 = scalar_lea.vmem [#allocation8], %s330
        // Predicated region
        $region45: #{tpu_custom_call.1} parent=27 // pred_check
          %p332 = pneg %p108
        $region46: #{tpu_custom_call.1} parent=27 // pred_check_branch
          %334 = sbr.rel (%p332) target = $region48
        $region47: #{tpu_custom_call.1} parent=27 // pred_region
          %s336 = ssub.s32 256, 256
          %337 = vsyncadd %s328, %s336
          %s338 = smul.addr %s26, 2
          %s339 = smul.addr %s338, 128
          %s340 = scalar_lea.hbm %s2, %s339
          %s342 = sshll.u32 %s331, 4
          %s343 = int_to_ptr.vmem [resolvable:$true] %s342
          %345 = dma.vmem_to_hbm [thread:$0]  %s343, 256, %s340, %s328
        $region48: #{tpu_custom_call.1} parent=27 // pred_fallthru
          _
      $region28: #{tpu_custom_call.1} parent=5 // pred_fallthru
        _
      %p346 = scmp.le.s32.totalorder 2, %s17
      // Predicated region
      $region49: #{tpu_custom_call.1} parent=5 // pred_check
        %p347 = pneg %p346
      $region50: #{tpu_custom_call.1} parent=5 // pred_check_branch
        %349 = sbr.rel (%p347) target = $region52
      $region51: #{tpu_custom_call.1} parent=5 // pred_region
        %s350 = ssub.s32 %s17, 2
        // Predicated region
        $region53: #{tpu_custom_call.1} parent=51 // pred_check
          %p351 = pneg %p114
        $region54: #{tpu_custom_call.1} parent=51 // pred_check_branch
          %353 = sbr.rel (%p351) target = $region56
        $region55: #{tpu_custom_call.1} parent=51 // pred_region
          %s354 = sand.u32 %s99, 1
          %s355 = scalar_lea.sflag [#allocation5], %s354
          %s356 = sand.u32 %s99, 1
          %s357 = smul.addr %s356, 16
          %s358 = scalar_lea.vmem [#allocation8], %s357
          %359 = dma.done %s355, 256
        $region56: #{tpu_custom_call.1} parent=51 // pred_fallthru
          _
      $region52: #{tpu_custom_call.1} parent=5 // pred_fallthru
        _
    $region6: #{tpu_custom_call.1} parent=1 // loop_footer
      %s21 = sadd.s32 1, %s17
    $region7: #{tpu_custom_call.1} parent=1 // loop_footer_branch
      %16 = sbr.rel target = $region3
    $region8: #{tpu_custom_call.1} parent=1 // loop_exit
      _
    %360 = vsyncpa [#allocation4], 1
    %s361 = scalar_lea.sflag [#allocation4], 1
    %362 = vsyncpa %s361, 1
    %363 = vsyncpa [#allocation7], 1
    %s364 = scalar_lea.sflag [#allocation7], 1
    %365 = vsyncpa %s364, 1
    %366 = vsyncpa [#allocation5], 1
    %s367 = scalar_lea.sflag [#allocation5], 1
    %368 = vsyncpa %s367, 1

</llo_original>
